<compile_context>
chip_gen: v7x
topology: tpu7x:2x2x1
jax: 0.10.0
libtpu: 0.0.40
codegen_flags: <defaults>
</compile_context>

<pallas_src>
import functools
import math

import jax
import jax.numpy as jnp
import numpy as np
from jax.experimental import pallas as pl
from jax.experimental.pallas import tpu as pltpu


# ----------------------------------------------------------------------------
# pltpu.roll convention probe (tiny one-off kernel; guarantees correct shift
# direction regardless of the primitive's sign convention).
# ----------------------------------------------------------------------------
def _detect_roll_sign():
    """+1 if pltpu.roll(x, s, axis) == np.roll(x, s, axis), else -1."""
    n, c = 32, 8

    def kern(x_ref, o_ref):
        o_ref[...] = pltpu.roll(x_ref[...], shift=1, axis=0)

    x = jnp.arange(n * c, dtype=jnp.float32).reshape(n, c)
    y = pl.pallas_call(kern, out_shape=jax.ShapeDtypeStruct((n, c), jnp.float32))(x)
    return 1 if float(jax.device_get(y)[1, 0]) == 0.0 else -1


def _roll_rows(a, k, n, sign):
    """result[i] = a[(i - k) mod n]  (np.roll semantics)."""
    return pltpu.roll(a, shift=(sign * k) % n, axis=0)


# ----------------------------------------------------------------------------
# In-kernel 3x3 'same' conv on a width-padded, row-flattened image.
# ----------------------------------------------------------------------------
def _conv3x3_flat(x, w_ref, b_ref, m_ref, *, H, Wp, relu, roll_sign):
    """x:     (H*Wp, Cin) values, zero in the two border columns.
       w_ref: (3, 3*Cin, Cout) bf16 ref, rows ordered [kx*Cin + ci] per ky.
       b_ref: (1, Cout) f32 ref.
       m_ref: (H*Wp, 1) f32 ref, 0.0 at border columns else 1.0.
       Returns (H*Wp, Cout) f32 with border columns zeroed."""
    HWp = H * Wp
    xf = x.astype(jnp.float32)
    left = _roll_rows(xf, 1, HWp, roll_sign)     # value at r-1 (kx = 0 tap)
    right = _roll_rows(xf, -1, HWp, roll_sign)   # value at r+1 (kx = 2 tap)
    # dx taps folded into the contraction: K = 3 * Cin
    patch = jnp.concatenate([left, xf, right], axis=-1).astype(jnp.bfloat16)

    r0 = jnp.dot(patch, w_ref[0], preferred_element_type=jnp.float32)  # ky=0
    r1 = jnp.dot(patch, w_ref[1], preferred_element_type=jnp.float32)  # ky=1
    r2 = jnp.dot(patch, w_ref[2], preferred_element_type=jnp.float32)  # ky=2

    # Fold the ky taps: shift the per-ky results by +-Wp rows; rows that would
    # read outside the image (zero H-halo) are masked to 0.
    rows = jax.lax.broadcasted_iota(jnp.int32, (HWp, 1), 0)
    top = jnp.where(rows >= Wp, _roll_rows(r0, Wp, HWp, roll_sign), 0.0)
    bot = jnp.where(rows < HWp - Wp, _roll_rows(r2, -Wp, HWp, roll_sign), 0.0)

    acc = r1 + top + bot + b_ref[...]
    if relu:
        acc = jnp.maximum(acc, 0.0)
    # Keep the stored zero border columns zero (they are the next conv's halo).
    return acc * m_ref[...]


# ----------------------------------------------------------------------------
# Pallas kernels.
# ----------------------------------------------------------------------------
def _conv_kernel(x_ref, w_ref, b_ref, m_ref, o_ref, *, H, Wp, relu, roll_sign):
    y = _conv3x3_flat(x_ref[0], w_ref, b_ref, m_ref, H=H, Wp=Wp, relu=relu,
                      roll_sign=roll_sign)
    o_ref[0] = y.astype(o_ref.dtype)


def _conv_res_kernel(x_ref, w_ref, b_ref, m_ref, r_ref, o_ref, *, H, Wp, relu,
                     res_scale, roll_sign):
    y = _conv3x3_flat(x_ref[0], w_ref, b_ref, m_ref, H=H, Wp=Wp, relu=relu,
                      roll_sign=roll_sign)
    out = r_ref[0].astype(jnp.float32) + res_scale * y
    o_ref[0] = out.astype(o_ref.dtype)


def _resblock_kernel(x_ref, w0_ref, b0_ref, w1_ref, b1_ref, m_ref, o_ref, *,
                     H, Wp, res_scale, roll_sign):
    """Fused ResNetBlock: out = x + res_scale * conv1(relu(conv0(x)))."""
    x = x_ref[0]
    t = _conv3x3_flat(x, w0_ref, b0_ref, m_ref, H=H, Wp=Wp, relu=True,
                      roll_sign=roll_sign)
    u = _conv3x3_flat(t, w1_ref, b1_ref, m_ref, H=H, Wp=Wp, relu=False,
                      roll_sign=roll_sign)
    out = x.astype(jnp.float32) + res_scale * u
    o_ref[0] = out.astype(o_ref.dtype)


# ----------------------------------------------------------------------------
# pallas_call wrappers.
# ----------------------------------------------------------------------------
_VMEM_LIMIT = 48 * 1024 * 1024


def _compiler_params():
    return pltpu.CompilerParams(dimension_semantics=("parallel",),
                                vmem_limit_bytes=_VMEM_LIMIT)


def conv_flat(h, p, mask, H, W, *, relu=False, residual=None, res_scale=1.0,
              out_dtype=jnp.bfloat16, roll_sign=1):
    """One 3x3 conv (+bias, optional ReLU, optional residual add)."""
    N, HWp, Cin = h.shape
    Wp = W + 2
    assert HWp == H * Wp
    wk, b = p["w"], p["b"]
    Cout = wk.shape[-1]

    flops = int(2 * N * H * W * 9 * Cin * Cout)
    in_bytes = (N * HWp * Cin * np.dtype(h.dtype).itemsize + wk.size * 2 +
                b.size * 4 + mask.size * 4)
    if residual is not None:
        in_bytes += N * HWp * Cout * np.dtype(residual.dtype).itemsize
    out_bytes = N * HWp * Cout * np.dtype(out_dtype).itemsize
    cost = pl.CostEstimate(flops=flops, transcendentals=0,
                           bytes_accessed=int(in_bytes + out_bytes))

    in_specs = [
        pl.BlockSpec((1, HWp, Cin), lambda n: (n, 0, 0)),
        pl.BlockSpec((3, 3 * Cin, Cout), lambda n: (0, 0, 0)),
        pl.BlockSpec((1, Cout), lambda n: (0, 0)),
        pl.BlockSpec((HWp, 1), lambda n: (0, 0)),
    ]
    args = [h, wk, b, mask]
    if residual is None:
        kernel = functools.partial(_conv_kernel, H=H, Wp=Wp, relu=relu,
                                   roll_sign=roll_sign)
    else:
        in_specs.append(pl.BlockSpec((1, HWp, Cout), lambda n: (n, 0, 0)))
        args.append(residual)
        kernel = functools.partial(_conv_res_kernel, H=H, Wp=Wp, relu=relu,
                                   res_scale=res_scale, roll_sign=roll_sign)

    return pl.pallas_call(
        kernel,
        out_shape=jax.ShapeDtypeStruct((N, HWp, Cout), out_dtype),
        grid=(N,),
        in_specs=in_specs,
        out_specs=pl.BlockSpec((1, HWp, Cout), lambda n: (n, 0, 0)),
        compiler_params=_compiler_params(),
        cost_estimate=cost,
    )(*args)


def resblock_flat(h, blk, mask, H, W, *, res_scale=1.0, roll_sign=1):
    """One fused ResNet block: single pallas_call, intermediate stays in VMEM."""
    N, HWp, C = h.shape
    Wp = W + 2
    assert HWp == H * Wp
    w0, b0 = blk["c0"]["w"], blk["c0"]["b"]
    w1, b1 = blk["c1"]["w"], blk["c1"]["b"]

    flops = int(2 * 2 * N * H * W * 9 * C * C)
    bytes_accessed = int(2 * N * HWp * C * 2 + (w0.size + w1.size) * 2 +
                         (b0.size + b1.size) * 4 + mask.size * 4)
    cost = pl.CostEstimate(flops=flops, transcendentals=0,
                           bytes_accessed=bytes_accessed)

    kernel = functools.partial(_resblock_kernel, H=H, Wp=Wp,
                               res_scale=res_scale, roll_sign=roll_sign)
    return pl.pallas_call(
        kernel,
        out_shape=jax.ShapeDtypeStruct((N, HWp, C), h.dtype),
        grid=(N,),
        in_specs=[
            pl.BlockSpec((1, HWp, C), lambda n: (n, 0, 0)),
            pl.BlockSpec((3, 3 * C, C), lambda n: (0, 0, 0)),
            pl.BlockSpec((1, C), lambda n: (0, 0)),
            pl.BlockSpec((3, 3 * C, C), lambda n: (0, 0, 0)),
            pl.BlockSpec((1, C), lambda n: (0, 0)),
            pl.BlockSpec((HWp, 1), lambda n: (0, 0)),
        ],
        out_specs=pl.BlockSpec((1, HWp, C), lambda n: (n, 0, 0)),
        compiler_params=_compiler_params(),
        cost_estimate=cost,
    )(h, w0, b0, w1, b1, mask)


# ----------------------------------------------------------------------------
# Host-side layout glue (boundary only -- no per-layer padding).
# ----------------------------------------------------------------------------
def to_flat_padded(x):          # (N,H,W,C) -> (N, H*(W+2), C), zero W-borders
    N, H, W, C = x.shape
    xp = jnp.pad(x, ((0, 0), (0, 0), (1, 1), (0, 0)))
    return xp.reshape(N, H * (W + 2), C)


def from_flat_padded(h, H, W):  # inverse of to_flat_padded
    N, _, C = h.shape
    return h.reshape(N, H, W + 2, C)[:, :, 1:W + 1, :]


def border_mask(H, W):
    Wp = W + 2
    col = jnp.arange(Wp)
    m = ((col != 0) & (col != Wp - 1)).astype(jnp.float32)
    return jnp.tile(m, (H,)).reshape(H * Wp, 1)


def pixel_shuffle_nhwc(x, r):
    # NHWC equivalent of torch.nn.PixelShuffle (channel order c*r*r + i*r + j)
    N, H, W, C = x.shape
    Co = C // (r * r)
    x = x.reshape(N, H, W, Co, r, r)
    x = jnp.transpose(x, (0, 1, 4, 2, 5, 3))
    return x.reshape(N, H * r, W * r, Co)


# ----------------------------------------------------------------------------
# Parameters.  Weights are stored bf16 as (ky, kx*Cin, Cout); biases f32.
# ----------------------------------------------------------------------------
def _conv_params(key, cin, cout):
    kw, kb = jax.random.split(key)
    w = jax.random.normal(kw, (3, 3, cin, cout), jnp.float32) / math.sqrt(9 * cin)
    b = 0.01 * jax.random.normal(kb, (cout,), jnp.float32)
    return {"w": w.reshape(3, 3 * cin, cout).astype(jnp.bfloat16),
            "b": b.reshape(1, cout)}


def init_srresnet_params(key, in_nc, out_nc, nf, nb, upscale):
    if upscale == 3:
        # TODO(synk): single x3 pixelshuffle block not wired up.
        raise NotImplementedError("upscale == 3 is not supported")
    n_upscale = int(math.log(upscale, 2))
    keys = iter(jax.random.split(key, 4 + 2 * nb + n_upscale))
    return {
        "fea": _conv_params(next(keys), in_nc, nf),
        "blocks": [{"c0": _conv_params(next(keys), nf, nf),
                    "c1": _conv_params(next(keys), nf, nf)}
                   for _ in range(nb)],
        "lr": _conv_params(next(keys), nf, nf),
        "ups": [_conv_params(next(keys), nf, nf * 4) for _ in range(n_upscale)],
        "hr0": _conv_params(next(keys), nf, nf),
        "hr1": _conv_params(next(keys), nf, out_nc),
    }


# ----------------------------------------------------------------------------
# Forward pass (Pallas) mirroring SRResNet.forward.
# ----------------------------------------------------------------------------
def srresnet_forward(params, x, *, res_scale=1.0, roll_sign=1):
    N, H, W, _ = x.shape
    mask = border_mask(H, W)
    h = to_flat_padded(x.astype(jnp.bfloat16))

    # fea_conv (no act)
    fea = conv_flat(h, params["fea"], mask, H, W, roll_sign=roll_sign)
    hh = fea
    # ShortcutBlock( nb x ResNetBlock + LR_conv )
    for blk in params["blocks"]:
        hh = resblock_flat(hh, blk, mask, H, W, res_scale=res_scale,
                           roll_sign=roll_sign)
    hh = conv_flat(hh, params["lr"], mask, H, W, residual=fea,
                   roll_sign=roll_sign)

    # pixelshuffle upsample blocks: conv(nf->4nf) -> shuffle(2) -> relu
    # (ReLU commutes with the pixel-shuffle permutation, so it is fused here.)
    for up in params["ups"]:
        t = conv_flat(hh, up, mask, H, W, relu=True, roll_sign=roll_sign)
        t = pixel_shuffle_nhwc(from_flat_padded(t, H, W), 2)
        H, W = 2 * H, 2 * W
        mask = border_mask(H, W)
        hh = to_flat_padded(t)

    # HR_conv0 (+relu), HR_conv1 (no act)
    hh = conv_flat(hh, params["hr0"], mask, H, W, relu=True,
                   roll_sign=roll_sign)
    out = conv_flat(hh, params["hr1"], mask, H, W, out_dtype=jnp.float32,
                    roll_sign=roll_sign)
    return from_flat_padded(out, H, W)


# ----------------------------------------------------------------------------
# Pure-JAX f32 reference (exact PyTorch op order) for validation.
# ----------------------------------------------------------------------------
def _conv3x3_ref(x, wk, b):
    cin = wk.shape[1] // 3
    cout = wk.shape[2]
    w4 = wk.astype(jnp.float32).reshape(3, 3, cin, cout)
    y = jax.lax.conv_general_dilated(
        x, w4, window_strides=(1, 1), padding="SAME",
        dimension_numbers=("NHWC", "HWIO", "NHWC"))
    return y + b.reshape(1, 1, 1, cout)


def srresnet_ref(params, x, res_scale=1.0):
    fea = _conv3x3_ref(x, params["fea"]["w"], params["fea"]["b"])
    h = fea
    for blk in params["blocks"]:
        t = jnp.maximum(_conv3x3_ref(h, blk["c0"]["w"], blk["c0"]["b"]), 0.0)
        h = h + res_scale * _conv3x3_ref(t, blk["c1"]["w"], blk["c1"]["b"])
    h = fea + _conv3x3_ref(h, params["lr"]["w"], params["lr"]["b"])
    for up in params["ups"]:
        h = _conv3x3_ref(h, up["w"], up["b"])
        h = pixel_shuffle_nhwc(h, 2)
        h = jnp.maximum(h, 0.0)
    h = jnp.maximum(_conv3x3_ref(h, params["hr0"]["w"], params["hr0"]["b"]), 0.0)
    return _conv3x3_ref(h, params["hr1"]["w"], params["hr1"]["b"])


if __name__ == "__main__":
    # Scaled-down SRResNet config (module defaults are nf=64, nb=16, upscale=4).
    IN_NC, OUT_NC, NF, NB, UPSCALE = 3, 3, 16, 4, 4
    N, H, W = 2, 16, 16

    roll_sign = _detect_roll_sign()

    key = jax.random.PRNGKey(0)
    kp, kx = jax.random.split(key)
    params = init_srresnet_params(kp, IN_NC, OUT_NC, NF, NB, UPSCALE)
    # PyTorch input would be NCHW (2, 3, 16, 16); we use the NHWC equivalent.
    x = jax.random.normal(kx, (N, H, W, IN_NC), jnp.float32)

    fwd = jax.jit(functools.partial(srresnet_forward, roll_sign=roll_sign))
    out = jax.block_until_ready(fwd(params, x))
    assert out.shape == (N, H * UPSCALE, W * UPSCALE, OUT_NC), out.shape
    assert out.dtype == jnp.float32

    ref = jax.block_until_ready(jax.jit(srresnet_ref)(params, x))
    scale = max(1.0, float(jnp.max(jnp.abs(ref))))
    err = float(jnp.max(jnp.abs(out - ref)))
    # bf16 activation storage / bf16 MXU operands -> allow a few percent.
    assert err < 0.06 * scale, f"Pallas/reference mismatch: {err} (scale {scale})"

    print("KERNEL_OK")
</pallas_src>

<mosaic_0001>
module attributes {stable_mosaic.version = 11 : i64} {
  func.func @kern(%arg0: memref<32x8xf32, #tpu.memory_space<vmem>>, %arg1: memref<32x8xf32, #tpu.memory_space<vmem>>) attributes {dimension_semantics = [], scalar_prefetch = 0 : i64, scratch_operands = 0 : i64, tpu.core_type = #tpu.core_type<tc>} {
    %c0 = arith.constant 0 : index
    %c0_0 = arith.constant 0 : index
    %0 = vector.load %arg0[%c0, %c0_0] : memref<32x8xf32, #tpu.memory_space<vmem>>, vector<32x8xf32>
    %c1_i32 = arith.constant 1 : i32
    %1 = tpu.dynamic_rotate %0 by %c1_i32 dim 0 : vector<32x8xf32>, i32 -> vector<32x8xf32>
    %c0_1 = arith.constant 0 : index
    %c0_2 = arith.constant 0 : index
    %2 = vector.load %arg1[%c0_1, %c0_2] : memref<32x8xf32, #tpu.memory_space<vmem>>, vector<32x8xf32>
    tpu.vector_store %arg1[%c0_1, %c0_2], %1 {strides = array<i32>} : memref<32x8xf32, #tpu.memory_space<vmem>>, vector<32x8xf32>,
    return
  }
}

</mosaic_0001>

<llo_original>
// kernel: tpu_custom_call.1
$region0: #{tpu_custom_call.1}
  #allocation0 [shape = 'u32[]', space=smem, size = 0x4, offset = 0x4, fixed_abs, tag = 'smem constant byte address 0x4 - core index']
  #allocation1 [shape = 'u32[144,128]{1,0:T(1,128)}', space=vmem, size = 0x12000, scoped, tag = 'internal scratch']
  %s0 = inlined_call_operand.vmem [shape: f32[32,8], index: 0, kind: input, shape index: {}]
  %s1 = inlined_call_operand.vmem [shape: f32[32,8], index: 1, kind: output, shape index: {}]
  %s2 = sld [smem:[#allocation0]]
  $region14: #{tpu_custom_call.1} parent=0
    _
  %s4 = ssub.s32 1, %s2
  %s5 = scalar_select 0, %s4, %s2
  // Predicated region
  $region2: #{tpu_custom_call.1} parent=0 // pred_check
    _
  $region3: #{tpu_custom_call.1} parent=0 // pred_check_branch
    %7 = sbr.rel (0) target = $region5
  $region4: #{tpu_custom_call.1} parent=0 // pred_region
    _
  $region5: #{tpu_custom_call.1} parent=0 // pred_fallthru
    _
  %v8 = vld [vmem:[%s0] sm:$0xff]
  %v9 = vld [vmem:[%s0 + $0x8] sm:$0xff]
  %v10 = vld [vmem:[%s0 + $0x10] sm:$0xff]
  %v11 = vld [vmem:[%s0 + $0x18] sm:$0xff]
  %v12 = vrot.slane %v8, 7
  %v13 = vrot.slane %v9, 7
  %v14 = vrot.slane %v10, 7
  %v15 = vrot.slane %v11, 7
  %v16 = vlaneseq
  %v17 = vshrl.u32 %v16, 7
  %vm18 = vcmp.lt.s32.totalorder %v17, 1
  %v19 = vsel %vm18, %v14, %v15
  %v20 = vsel %vm18, %v13, %v14
  %v21 = vsel %vm18, %v12, %v13
  %v22 = vsel %vm18, %v15, %v12
  %vm23 = vcmask 64512
  %24 = vst.msk [vmem:[%s1] sm:$0xff] %vm23, %v22
  %25 = vst.msk [vmem:[%s1 + $0x8] sm:$0xff] %vm23, %v21
  %26 = vst.msk [vmem:[%s1 + $0x10] sm:$0xff] %vm23, %v20
  %27 = vst.msk [vmem:[%s1 + $0x18] sm:$0xff] %vm23, %v19
  // Predicated region
  $region6: #{tpu_custom_call.1} parent=0 // pred_check
    _
  $region7: #{tpu_custom_call.1} parent=0 // pred_check_branch
    %29 = sbr.rel (0) target = $region9
  $region8: #{tpu_custom_call.1} parent=0 // pred_region
    _
  $region9: #{tpu_custom_call.1} parent=0 // pred_fallthru
    _
  // Predicated region
  $region10: #{tpu_custom_call.1} parent=0 // pred_check
    _
  $region11: #{tpu_custom_call.1} parent=0 // pred_check_branch
    %31 = sbr.rel (0) target = $region13
  $region12: #{tpu_custom_call.1} parent=0 // pred_region
    _
  $region13: #{tpu_custom_call.1} parent=0 // pred_fallthru
    _

</llo_original>
